<compile_context>
chip_gen: v6e
topology: v6e:2x2x1
jax: 0.10.0
libtpu: 0.0.40
codegen_flags: <defaults>
</compile_context>

<pallas_src>
import functools

import jax
import jax.numpy as jnp
from jax import lax
from jax.experimental import pallas as pl
from jax.experimental.pallas import tpu as pltpu

HIDDEN = 256
FUSED = 2 * HIDDEN  # 512


def _round_up(x, m):
    return ((x + m - 1) // m) * m


def actor_kernel(x_ref, slab_ref, w3_ref, out_ref, *, s_pad, d_dim, p_dim):
    out_pad = out_ref.shape[-1]

    # Packed bf16 slab row layout (all offsets static, 16-row aligned):
    #   [0            : s_pad        ]  w1  = [w11 | w12]   (zero-padded rows)
    #   [s_pad        : s_pad + 256  ]  w2  = [w21 | w22]
    #   [s_pad + 256  : s_pad + 259  ]  b1, b2, b3 rows
    w1 = slab_ref[0:s_pad, :]                                   # (s_pad, 512) bf16
    w2 = slab_ref[s_pad:s_pad + HIDDEN, :]                      # (256, 512)  bf16
    bias = slab_ref[s_pad + HIDDEN:s_pad + HIDDEN + 3, :].astype(jnp.float32)
    b1 = bias[0:1, :]
    b2 = bias[1:2, :]
    b3 = bias[2:3, :out_pad]

    x = x_ref[...].astype(jnp.bfloat16)                         # (B, s_pad)

    # --- fused layer 1: (B, s_pad) @ (s_pad, 512), f32 accumulate -----------
    h = jnp.maximum(
        jnp.dot(x, w1, preferred_element_type=jnp.float32) + b1, 0.0)
    h1 = h[:, :HIDDEN].astype(jnp.bfloat16)   # discrete branch
    h2 = h[:, HIDDEN:].astype(jnp.bfloat16)   # parameter branch

    # --- layer 2: one (256, 512) slab, two dots on static column halves -----
    g1 = jnp.maximum(
        jnp.dot(h1, w2[:, :HIDDEN], preferred_element_type=jnp.float32)
        + b2[:, :HIDDEN], 0.0)
    g2 = jnp.maximum(
        jnp.dot(h2, w2[:, HIDDEN:], preferred_element_type=jnp.float32)
        + b2[:, HIDDEN:], 0.0)

    # --- heads: single fused (B, 512) @ (512, out_pad) dot -------------------
    # w3 rows[:256], cols[:D]    = w31 (discrete logits)
    #    rows[256:], cols[D:D+P] = w32 (mu pre-tanh); zeros elsewhere.
    g = jnp.concatenate([g1, g2], axis=-1).astype(jnp.bfloat16)  # (B, 512)
    raw = jnp.dot(g, w3_ref[...], preferred_element_type=jnp.float32) + b3

    col = lax.broadcasted_iota(jnp.int32, raw.shape, 1)
    is_prob = col < d_dim
    is_mu = jnp.logical_and(col >= d_dim, col < d_dim + p_dim)

    # Masked softmax over the discrete lanes [0:D].
    # Invariant: exp(f32.min - m) == 0 exactly, so `prob` is exactly zero in
    # all masked lanes (relied on by the final additive store). Do NOT take a
    # log/ratio of masked lanes without re-masking.
    neg = jnp.finfo(jnp.float32).min
    logits = jnp.where(is_prob, raw, neg)
    m = jnp.max(logits, axis=1, keepdims=True)
    e = jnp.exp(logits - m)
    denom = jnp.sum(e, axis=1, keepdims=True)
    prob = e / denom                       # exact divide: kernel is DMA-bound

    mu = jnp.tanh(raw)

    # Single lane-dense (B, out_pad) store: prob in [0:D], mu in [D:D+P].
    out_ref[...] = prob + jnp.where(is_mu, mu, 0.0)


def pack_actor_params(p):
    """Pack torch-layout params into the slabs the kernel expects (done once)."""
    S = p["w11"].shape[0]
    D = p["w31"].shape[1]
    P = p["w32"].shape[1]
    out_pad = max(128, _round_up(D + P, 128))
    assert out_pad <= FUSED, "head output padding exceeds bias-row width"

    s_pad = _round_up(S, 16)                       # bf16 sublane tile alignment
    rows = _round_up(s_pad + HIDDEN + 3, 16)

    slab = jnp.zeros((rows, FUSED), jnp.float32)
    slab = slab.at[:S, :HIDDEN].set(p["w11"])
    slab = slab.at[:S, HIDDEN:].set(p["w12"])
    slab = slab.at[s_pad:s_pad + HIDDEN, :HIDDEN].set(p["w21"])
    slab = slab.at[s_pad:s_pad + HIDDEN, HIDDEN:].set(p["w22"])
    slab = slab.at[s_pad + HIDDEN, :HIDDEN].set(p["b11"][0])
    slab = slab.at[s_pad + HIDDEN, HIDDEN:].set(p["b12"][0])
    slab = slab.at[s_pad + HIDDEN + 1, :HIDDEN].set(p["b21"][0])
    slab = slab.at[s_pad + HIDDEN + 1, HIDDEN:].set(p["b22"][0])
    slab = slab.at[s_pad + HIDDEN + 2, :D].set(p["b31"][0])
    slab = slab.at[s_pad + HIDDEN + 2, D:D + P].set(p["b32"][0])
    slab = slab.astype(jnp.bfloat16)               # (rows, 512) bf16

    w3 = jnp.zeros((FUSED, out_pad), jnp.float32)
    w3 = w3.at[:HIDDEN, :D].set(p["w31"])
    w3 = w3.at[HIDDEN:, D:D + P].set(p["w32"])
    w3 = w3.astype(jnp.bfloat16)                   # (512, out_pad) bf16

    # std / log_std are independent of x: compute once here, not per call.
    log_std = jnp.sum(p["log_std"], axis=0, keepdims=True) - 0.5
    std = jnp.exp(log_std)

    return {"slab": slab, "w3": w3, "std": std, "log_std": log_std,
            "S": S, "s_pad": s_pad, "D": D, "P": P, "out_pad": out_pad}


def actor_forward(x, packed, *, block_b=None):
    """block_b=None -> single ungridded call (lowest latency for small B).
    block_b=<rows> -> 1-D 'parallel' grid over batch with the weight slabs
    pinned to block (0,0) so they stay VMEM-resident across steps (use for
    large batches; on v7x this also engages the second TensorCore). Keep
    block_b small enough for v7x's 64 MiB VMEM."""
    B = x.shape[0]
    S, s_pad = packed["S"], packed["s_pad"]
    D, P, out_pad = packed["D"], packed["P"], packed["out_pad"]

    if S != s_pad:   # pad features to the slab's (zero) row padding
        x = jnp.pad(x, ((0, 0), (0, s_pad - S)))

    kernel = functools.partial(actor_kernel, s_pad=s_pad, d_dim=D, p_dim=P)
    out_shape = jax.ShapeDtypeStruct((B, out_pad), jnp.float32)

    if block_b is None or block_b >= B:
        out = pl.pallas_call(
            kernel,
            out_shape=out_shape,
            in_specs=[pl.BlockSpec(memory_space=pltpu.VMEM)] * 3,
            out_specs=pl.BlockSpec(memory_space=pltpu.VMEM),
        )(x, packed["slab"], packed["w3"])
    else:
        assert B % block_b == 0, "batch must be a multiple of block_b"
        slab_shape = packed["slab"].shape
        w3_shape = packed["w3"].shape
        out = pl.pallas_call(
            kernel,
            out_shape=out_shape,
            grid_spec=pltpu.PrefetchScalarGridSpec(
                num_scalar_prefetch=0,
                grid=(B // block_b,),
                in_specs=[
                    pl.BlockSpec((block_b, s_pad), lambda i: (i, 0)),
                    pl.BlockSpec(slab_shape, lambda i: (0, 0)),   # resident
                    pl.BlockSpec(w3_shape, lambda i: (0, 0)),     # resident
                ],
                out_specs=pl.BlockSpec((block_b, out_pad), lambda i: (i, 0)),
            ),
            compiler_params=pltpu.CompilerParams(
                dimension_semantics=("parallel",)),
        )(x, packed["slab"], packed["w3"])

    discrete_prob = out[:, :D]
    mu = out[:, D:D + P]
    return discrete_prob, mu, packed["std"], packed["log_std"]


def init_actor_params(key, state_dim, discrete_action_dim, parameter_action_dim):
    """Deterministic init mimicking nn.Linear default (uniform +-1/sqrt(fan_in)).
    Weights stored as (in_features, out_features)."""
    def linear(key, fan_in, fan_out):
        kw, kb = jax.random.split(key)
        bound = 1.0 / jnp.sqrt(fan_in)
        w = jax.random.uniform(kw, (fan_in, fan_out), jnp.float32, -bound, bound)
        b = jax.random.uniform(kb, (1, fan_out), jnp.float32, -bound, bound)
        return w, b

    keys = jax.random.split(key, 6)
    w11, b11 = linear(keys[0], state_dim, HIDDEN)
    w12, b12 = linear(keys[1], state_dim, HIDDEN)
    w21, b21 = linear(keys[2], HIDDEN, HIDDEN)
    w22, b22 = linear(keys[3], HIDDEN, HIDDEN)
    w31, b31 = linear(keys[4], HIDDEN, discrete_action_dim)
    w32, b32 = linear(keys[5], HIDDEN, parameter_action_dim)
    # nn.Parameter(torch.zeros([10, parameter_action_dim]))
    log_std = jnp.zeros((10, parameter_action_dim), jnp.float32)
    return {
        "w11": w11, "b11": b11, "w12": w12, "b12": b12,
        "w21": w21, "b21": b21, "w22": w22, "b22": b22,
        "w31": w31, "b31": b31, "w32": w32, "b32": b32,
        "log_std": log_std,
    }


def actor_forward_ref(x, p):
    """Pure-JAX f32 reference of the torch forward for validation."""
    h1 = jnp.maximum(x @ p["w11"] + p["b11"], 0.0)
    h2 = jnp.maximum(x @ p["w12"] + p["b12"], 0.0)
    h1 = jnp.maximum(h1 @ p["w21"] + p["b21"], 0.0)
    h2 = jnp.maximum(h2 @ p["w22"] + p["b22"], 0.0)
    prob = jax.nn.softmax(h1 @ p["w31"] + p["b31"], axis=1)
    mu = jnp.tanh(h2 @ p["w32"] + p["b32"])
    log_std = jnp.sum(p["log_std"], axis=0, keepdims=True) - 0.5
    std = jnp.exp(log_std)
    return prob, mu, std, log_std


if __name__ == "__main__":
    batch = 2
    state_dim = 16
    discrete_action_dim = 4
    parameter_action_dim = 6
    # max_action is unused in Actor.forward.

    key = jax.random.PRNGKey(0)
    kx, kp = jax.random.split(key)
    params = init_actor_params(kp, state_dim, discrete_action_dim,
                               parameter_action_dim)
    packed = pack_actor_params(params)

    # Tolerances relaxed for bf16 weights vs the f32 reference.
    tols = (3e-2, 3e-2, 1e-5, 1e-5)

    # 1) primary small-shape check: ungridded latency path (B=2).
    x = jax.random.normal(kx, (batch, state_dim), jnp.float32)
    outs = jax.block_until_ready(actor_forward(x, packed))
    refs = actor_forward_ref(x, params)
    for o, r, tol in zip(outs, refs, tols):
        assert o.shape == r.shape and o.dtype == r.dtype
        assert jnp.max(jnp.abs(o - r)) < tol

    # 2) gridded path (parallel batch grid, resident weight slabs).
    xb = jax.random.normal(jax.random.PRNGKey(1), (16, state_dim), jnp.float32)
    outs_g = jax.block_until_ready(actor_forward(xb, packed, block_b=8))
    refs_g = actor_forward_ref(xb, params)
    for o, r, tol in zip(outs_g, refs_g, tols):
        assert o.shape == r.shape and o.dtype == r.dtype
        assert jnp.max(jnp.abs(o - r)) < tol

    print("KERNEL_OK")
</pallas_src>

<mosaic_0001>
module attributes {stable_mosaic.version = 11 : i64} {
  func.func @actor_kernel(%arg0: memref<2x16xf32, #tpu.memory_space<vmem>>, %arg1: memref<288x512xbf16, #tpu.memory_space<vmem>>, %arg2: memref<512x128xbf16, #tpu.memory_space<vmem>>, %arg3: memref<2x128xf32, #tpu.memory_space<vmem>>) attributes {dimension_semantics = [], scalar_prefetch = 0 : i64, scratch_operands = 0 : i64, tpu.core_type = #tpu.core_type<tc>} {
    %c0 = arith.constant 0 : index
    %c0_0 = arith.constant 0 : index
    %0 = vector.load %arg1[%c0, %c0_0] : memref<288x512xbf16, #tpu.memory_space<vmem>>, vector<16x512xbf16>
    %c16 = arith.constant 16 : index
    %c0_1 = arith.constant 0 : index
    %1 = vector.load %arg1[%c16, %c0_1] : memref<288x512xbf16, #tpu.memory_space<vmem>>, vector<256x512xbf16>
    %c272 = arith.constant 272 : index
    %c0_2 = arith.constant 0 : index
    %2 = vector.load %arg1[%c272, %c0_2] : memref<288x512xbf16, #tpu.memory_space<vmem>>, vector<3x512xbf16>
    %3 = arith.extf %2 : vector<3x512xbf16> to vector<3x512xf32>
    %4 = vector.extract_strided_slice %3 {offsets = [0, 0], sizes = [1, 512], strides = [1, 1]} : vector<3x512xf32> to vector<1x512xf32>
    %5 = vector.extract_strided_slice %3 {offsets = [1, 0], sizes = [1, 512], strides = [1, 1]} : vector<3x512xf32> to vector<1x512xf32>
    %6 = vector.extract_strided_slice %3 {offsets = [2, 0], sizes = [1, 128], strides = [1, 1]} : vector<3x512xf32> to vector<1x128xf32>
    %c0_3 = arith.constant 0 : index
    %c0_4 = arith.constant 0 : index
    %7 = vector.load %arg0[%c0_3, %c0_4] : memref<2x16xf32, #tpu.memory_space<vmem>>, vector<2x16xf32>
    %8 = arith.truncf %7 : vector<2x16xf32> to vector<2x16xbf16>
    %cst = arith.constant dense<0.000000e+00> : vector<2x512xf32>
    %9 = tpu.matmul %8, %0, %cst {dimension_numbers = #tpu.dot_dimension_numbers<[1], [0], [0], [1], [0, 0, 1, 1], [], []>} : vector<2x16xbf16>, vector<16x512xbf16>, vector<2x512xf32> -> vector<2x512xf32>
    %10 = vector.broadcast %4 : vector<1x512xf32> to vector<2x512xf32>
    %11 = arith.addf %9, %10 : vector<2x512xf32>
    %cst_5 = arith.constant 0.000000e+00 : f32
    %12 = vector.broadcast %cst_5 : f32 to vector<2x512xf32>
    %13 = arith.maximumf %11, %12 : vector<2x512xf32>
    %14 = vector.extract_strided_slice %13 {offsets = [0, 0], sizes = [2, 256], strides = [1, 1]} : vector<2x512xf32> to vector<2x256xf32>
    %15 = arith.truncf %14 : vector<2x256xf32> to vector<2x256xbf16>
    %16 = vector.extract_strided_slice %13 {offsets = [0, 256], sizes = [2, 256], strides = [1, 1]} : vector<2x512xf32> to vector<2x256xf32>
    %17 = arith.truncf %16 : vector<2x256xf32> to vector<2x256xbf16>
    %18 = vector.extract_strided_slice %1 {offsets = [0, 0], sizes = [256, 256], strides = [1, 1]} : vector<256x512xbf16> to vector<256x256xbf16>
    %cst_6 = arith.constant dense<0.000000e+00> : vector<2x256xf32>
    %19 = tpu.matmul %15, %18, %cst_6 {dimension_numbers = #tpu.dot_dimension_numbers<[1], [0], [0], [1], [0, 0, 1, 1], [], []>} : vector<2x256xbf16>, vector<256x256xbf16>, vector<2x256xf32> -> vector<2x256xf32>
    %20 = vector.extract_strided_slice %5 {offsets = [0, 0], sizes = [1, 256], strides = [1, 1]} : vector<1x512xf32> to vector<1x256xf32>
    %21 = vector.broadcast %20 : vector<1x256xf32> to vector<2x256xf32>
    %22 = arith.addf %19, %21 : vector<2x256xf32>
    %cst_7 = arith.constant 0.000000e+00 : f32
    %23 = vector.broadcast %cst_7 : f32 to vector<2x256xf32>
    %24 = arith.maximumf %22, %23 : vector<2x256xf32>
    %25 = vector.extract_strided_slice %1 {offsets = [0, 256], sizes = [256, 256], strides = [1, 1]} : vector<256x512xbf16> to vector<256x256xbf16>
    %cst_8 = arith.constant dense<0.000000e+00> : vector<2x256xf32>
    %26 = tpu.matmul %17, %25, %cst_8 {dimension_numbers = #tpu.dot_dimension_numbers<[1], [0], [0], [1], [0, 0, 1, 1], [], []>} : vector<2x256xbf16>, vector<256x256xbf16>, vector<2x256xf32> -> vector<2x256xf32>
    %27 = vector.extract_strided_slice %5 {offsets = [0, 256], sizes = [1, 256], strides = [1, 1]} : vector<1x512xf32> to vector<1x256xf32>
    %28 = vector.broadcast %27 : vector<1x256xf32> to vector<2x256xf32>
    %29 = arith.addf %26, %28 : vector<2x256xf32>
    %cst_9 = arith.constant 0.000000e+00 : f32
    %30 = vector.broadcast %cst_9 : f32 to vector<2x256xf32>
    %31 = arith.maximumf %29, %30 : vector<2x256xf32>
    %32 = tpu.concatenate %24, %31 in 1 : vector<2x256xf32>, vector<2x256xf32> -> vector<2x512xf32>
    %33 = arith.truncf %32 : vector<2x512xf32> to vector<2x512xbf16>
    %c0_10 = arith.constant 0 : index
    %c0_11 = arith.constant 0 : index
    %34 = vector.load %arg2[%c0_10, %c0_11] : memref<512x128xbf16, #tpu.memory_space<vmem>>, vector<512x128xbf16>
    %cst_12 = arith.constant dense<0.000000e+00> : vector<2x128xf32>
    %35 = tpu.matmul %33, %34, %cst_12 {dimension_numbers = #tpu.dot_dimension_numbers<[1], [0], [0], [1], [0, 0, 1, 1], [], []>} : vector<2x512xbf16>, vector<512x128xbf16>, vector<2x128xf32> -> vector<2x128xf32>
    %36 = vector.broadcast %6 : vector<1x128xf32> to vector<2x128xf32>
    %37 = arith.addf %35, %36 : vector<2x128xf32>
    %38 = tpu.iota {dimensions = array<i32: 1>} : vector<2x128xi32>
    %c4_i32 = arith.constant 4 : i32
    %39 = vector.broadcast %c4_i32 : i32 to vector<2x128xi32>
    %40 = arith.cmpi slt, %38, %39 : vector<2x128xi32>
    %c4_i32_13 = arith.constant 4 : i32
    %41 = vector.broadcast %c4_i32_13 : i32 to vector<2x128xi32>
    %42 = arith.cmpi sge, %38, %41 : vector<2x128xi32>
    %c10_i32 = arith.constant 10 : i32
    %43 = vector.broadcast %c10_i32 : i32 to vector<2x128xi32>
    %44 = arith.cmpi slt, %38, %43 : vector<2x128xi32>
    %45 = arith.andi %42, %44 : vector<2x128xi1>
    %cst_14 = arith.constant -3.40282347E+38 : f32
    %46 = vector.broadcast %cst_14 : f32 to vector<2x128xf32>
    %47 = arith.select %40, %37, %46 : vector<2x128xi1>, vector<2x128xf32>
    %cst_15 = arith.constant dense<0xFF800000> : vector<2xf32>
    %48 = vector.multi_reduction <maximumf>, %47, %cst_15 [1] : vector<2x128xf32> to vector<2xf32>
    %49 = vector.shape_cast %48 : vector<2xf32> to vector<2x1xf32>
    %50 = vector.broadcast %49 : vector<2x1xf32> to vector<2x128xf32>
    %51 = arith.subf %47, %50 : vector<2x128xf32>
    %52 = math.exp %51 : vector<2x128xf32>
    %cst_16 = arith.constant dense<0.000000e+00> : vector<2xf32>
    %53 = vector.multi_reduction <add>, %52, %cst_16 [1] : vector<2x128xf32> to vector<2xf32>
    %54 = vector.shape_cast %53 : vector<2xf32> to vector<2x1xf32>
    %55 = vector.broadcast %54 : vector<2x1xf32> to vector<2x128xf32>
    %56 = arith.divf %52, %55 : vector<2x128xf32>
    %57 = math.tanh %37 : vector<2x128xf32>
    %cst_17 = arith.constant 0.000000e+00 : f32
    %58 = vector.broadcast %cst_17 : f32 to vector<2x128xf32>
    %59 = arith.select %45, %57, %58 : vector<2x128xi1>, vector<2x128xf32>
    %60 = arith.addf %56, %59 : vector<2x128xf32>
    %c0_18 = arith.constant 0 : index
    %c0_19 = arith.constant 0 : index
    %61 = vector.load %arg3[%c0_18, %c0_19] : memref<2x128xf32, #tpu.memory_space<vmem>>, vector<2x128xf32>
    tpu.vector_store %arg3[%c0_18, %c0_19], %60 {strides = array<i32>} : memref<2x128xf32, #tpu.memory_space<vmem>>, vector<2x128xf32>,
    return
  }
}

</mosaic_0001>

<llo_original>
// kernel: tpu_custom_call.1
$region0: #{tpu_custom_call.1}
  #allocation0 [shape = 'u32[]', space=smem, size = 0x4, offset = 0x4, fixed_abs, tag = 'smem constant byte address 0x4 - core index']
  #allocation1 [shape = 'u32[144,128]{1,0:T(1,128)}', space=vmem, size = 0x12000, scoped, tag = 'internal scratch']
  %s0 = inlined_call_operand.hbm [shape: f32[2,16], index: 0, kind: input, shape index: {}]
  %s1 = inlined_call_operand.hbm [shape: bf16[288,512], index: 1, kind: input, shape index: {}]
  %s2 = inlined_call_operand.hbm [shape: bf16[512,128], index: 2, kind: input, shape index: {}]
  %s3 = inlined_call_operand.hbm [shape: f32[2,128], index: 3, kind: output, shape index: {}]
  %s4 = sld [smem:[#allocation0]]
  $region34: #{tpu_custom_call.1} parent=0
    _
  %s6 = ssub.s32 1, %s4
  %s7 = scalar_select 0, %s6, %s4
  $region1: #{tpu_custom_call.1} parent=0
    #allocation2 [shape = 'u8[1024]{0}', space=vmem, size = 0x400, scoped, tag = 'input window, operand 0, single buffered']
    #allocation3 [shape = 's32[1]{0}', space=sflag, size = 0x4, scoped, tag = 'scoped memory for tpu_custom_call.1']
    #allocation4 [shape = 's32[1]{0}', space=sflag, size = 0x4, scoped, tag = 'scoped memory for tpu_custom_call.1']
    #allocation5 [shape = 'u8[294912]{0}', space=vmem, size = 0x48000, scoped, tag = 'input window, operand 1, single buffered']
    #allocation6 [shape = 's32[1]{0}', space=sflag, size = 0x4, scoped, tag = 'scoped memory for tpu_custom_call.1']
    #allocation7 [shape = 'u8[131072]{0}', space=vmem, size = 0x20000, scoped, tag = 'input window, operand 2, single buffered']
    #allocation8 [shape = 'u8[1024]{0}', space=vmem, size = 0x400, scoped, tag = 'output window, operand 0, single buffered']
    %8 = vsyncpa [#allocation3], 0
    %9 = vsyncpa [#allocation6], 0
    %10 = vsyncpa [#allocation4], 0
    // Predicated region
    $region2: #{tpu_custom_call.1} parent=1 // pred_check
      _
    $region3: #{tpu_custom_call.1} parent=1 // pred_check_branch
      %12 = sbr.rel (0) target = $region5
    $region4: #{tpu_custom_call.1} parent=1 // pred_region
      %s14 = ssub.s32 32, 32
      %15 = vsyncadd [#allocation3], %s14
      %s17 = sshll.u32 [#allocation2], 4
      %s18 = int_to_ptr.vmem [resolvable:$true] %s17
      %20 = dma.hbm_to_vmem [thread:$0]  %s0, 32, %s18, [#allocation3]
    $region5: #{tpu_custom_call.1} parent=1 // pred_fallthru
      _
    // Predicated region
    $region6: #{tpu_custom_call.1} parent=1 // pred_check
      _
    $region7: #{tpu_custom_call.1} parent=1 // pred_check_branch
      %22 = sbr.rel (0) target = $region9
    $region8: #{tpu_custom_call.1} parent=1 // pred_region
      %s24 = ssub.s32 9216, 9216
      %25 = vsyncadd [#allocation6], %s24
      %s26 = sshll.u32 [#allocation5], 4
      %s27 = int_to_ptr.vmem [resolvable:$true] %s26
      %32 = dma.hbm_to_vmem [thread:$0]  %s1, 9216, %s27, [#allocation6], 256, 256, 16
    $region9: #{tpu_custom_call.1} parent=1 // pred_fallthru
      _
    // Predicated region
    $region10: #{tpu_custom_call.1} parent=1 // pred_check
      _
    $region11: #{tpu_custom_call.1} parent=1 // pred_check_branch
      %34 = sbr.rel (0) target = $region13
    $region12: #{tpu_custom_call.1} parent=1 // pred_region
      %s36 = ssub.s32 4096, 4096
      %37 = vsyncadd [#allocation6], %s36
      %s38 = sshll.u32 [#allocation7], 4
      %s39 = int_to_ptr.vmem [resolvable:$true] %s38
      %44 = dma.hbm_to_vmem [thread:$0]  %s2, 4096, %s39, [#allocation6], 64, 64, 4
    $region13: #{tpu_custom_call.1} parent=1 // pred_fallthru
      _
    // Predicated region
    $region14: #{tpu_custom_call.1} parent=1 // pred_check
      _
    $region15: #{tpu_custom_call.1} parent=1 // pred_check_branch
      %46 = sbr.rel (0) target = $region17
    $region16: #{tpu_custom_call.1} parent=1 // pred_region
      %47 = dma.done [#allocation3], 32
    $region17: #{tpu_custom_call.1} parent=1 // pred_fallthru
      _
    // Predicated region
    $region18: #{tpu_custom_call.1} parent=1 // pred_check
      _
    $region19: #{tpu_custom_call.1} parent=1 // pred_check_branch
      %49 = sbr.rel (0) target = $region21
    $region20: #{tpu_custom_call.1} parent=1 // pred_region
      %50 = dma.done [#allocation6], 9216
    $region21: #{tpu_custom_call.1} parent=1 // pred_fallthru
      _
    // Predicated region
    $region22: #{tpu_custom_call.1} parent=1 // pred_check
      _
    $region23: #{tpu_custom_call.1} parent=1 // pred_check_branch
      %52 = sbr.rel (0) target = $region25
    $region24: #{tpu_custom_call.1} parent=1 // pred_region
      %53 = dma.done [#allocation6], 4096
    $region25: #{tpu_custom_call.1} parent=1 // pred_fallthru
      _
    %v55 = vld [vmem:[#allocation5] sm:$0xff]
    %v56 = vld [vmem:[#allocation5 + $0x8] sm:$0xff]
    %v57 = vld [vmem:[#allocation5 + $0x10] sm:$0xff]
    %v58 = vld [vmem:[#allocation5 + $0x18] sm:$0xff]
    %v59 = vld [vmem:[#allocation5 + $0x20] sm:$0xff]
    %v60 = vld [vmem:[#allocation5 + $0x28] sm:$0xff]
    %v61 = vld [vmem:[#allocation5 + $0x30] sm:$0xff]
    %v62 = vld [vmem:[#allocation5 + $0x38] sm:$0xff]
    %v63 = vld [vmem:[#allocation5 + $0x40] sm:$0xff]
    %v64 = vld [vmem:[#allocation5 + $0x48] sm:$0xff]
    %v65 = vld [vmem:[#allocation5 + $0x50] sm:$0xff]
    %v66 = vld [vmem:[#allocation5 + $0x58] sm:$0xff]
    %v67 = vld [vmem:[#allocation5 + $0x60] sm:$0xff]
    %v68 = vld [vmem:[#allocation5 + $0x68] sm:$0xff]
    %v69 = vld [vmem:[#allocation5 + $0x70] sm:$0xff]
    %v70 = vld [vmem:[#allocation5 + $0x78] sm:$0xff]
    %v71 = vld [vmem:[#allocation5 + $0x80] sm:$0xff]
    %v72 = vld [vmem:[#allocation5 + $0x88] sm:$0xff]
    %v73 = vld [vmem:[#allocation5 + $0x90] sm:$0xff]
    %v74 = vld [vmem:[#allocation5 + $0x98] sm:$0xff]
    %v75 = vld [vmem:[#allocation5 + $0xa0] sm:$0xff]
    %v76 = vld [vmem:[#allocation5 + $0xa8] sm:$0xff]
    %v77 = vld [vmem:[#allocation5 + $0xb0] sm:$0xff]
    %v78 = vld [vmem:[#allocation5 + $0xb8] sm:$0xff]
    %v79 = vld [vmem:[#allocation5 + $0xc0] sm:$0xff]
    %v80 = vld [vmem:[#allocation5 + $0xc8] sm:$0xff]
    %v81 = vld [vmem:[#allocation5 + $0xd0] sm:$0xff]
    %v82 = vld [vmem:[#allocation5 + $0xd8] sm:$0xff]
    %v83 = vld [vmem:[#allocation5 + $0xe0] sm:$0xff]
    %v84 = vld [vmem:[#allocation5 + $0xe8] sm:$0xff]
    %v85 = vld [vmem:[#allocation5 + $0xf0] sm:$0xff]
    %v86 = vld [vmem:[#allocation5 + $0xf8] sm:$0xff]
    %v87 = vld [vmem:[#allocation5 + $0x100] sm:$0xff]
    %v88 = vld [vmem:[#allocation5 + $0x108] sm:$0xff]
    %v89 = vld [vmem:[#allocation5 + $0x110] sm:$0xff]
    %v90 = vld [vmem:[#allocation5 + $0x118] sm:$0xff]
    %v91 = vld [vmem:[#allocation5 + $0x120] sm:$0xff]
    %v92 = vld [vmem:[#allocation5 + $0x128] sm:$0xff]
    %v93 = vld [vmem:[#allocation5 + $0x130] sm:$0xff]
    %v94 = vld [vmem:[#allocation5 + $0x138] sm:$0xff]
    %v95 = vld [vmem:[#allocation5 + $0x140] sm:$0xff]
    %v96 = vld [vmem:[#allocation5 + $0x148] sm:$0xff]
    %v97 = vld [vmem:[#allocation5 + $0x150] sm:$0xff]
    %v98 = vld [vmem:[#allocation5 + $0x158] sm:$0xff]
    %v99 = vld [vmem:[#allocation5 + $0x160] sm:$0xff]
    %v100 = vld [vmem:[#allocation5 + $0x168] sm:$0xff]
    %v101 = vld [vmem:[#allocation5 + $0x170] sm:$0xff]
    %v102 = vld [vmem:[#allocation5 + $0x178] sm:$0xff]
    %v103 = vld [vmem:[#allocation5 + $0x180] sm:$0xff]
    %v104 = vld [vmem:[#allocation5 + $0x188] sm:$0xff]
    %v105 = vld [vmem:[#allocation5 + $0x190] sm:$0xff]
    %v106 = vld [vmem:[#allocation5 + $0x198] sm:$0xff]
    %v107 = vld [vmem:[#allocation5 + $0x1a0] sm:$0xff]
    %v108 = vld [vmem:[#allocation5 + $0x1a8] sm:$0xff]
    %v109 = vld [vmem:[#allocation5 + $0x1b0] sm:$0xff]
    %v110 = vld [vmem:[#allocation5 + $0x1b8] sm:$0xff]
    %v111 = vld [vmem:[#allocation5 + $0x1c0] sm:$0xff]
    %v112 = vld [vmem:[#allocation5 + $0x1c8] sm:$0xff]
    %v113 = vld [vmem:[#allocation5 + $0x1d0] sm:$0xff]
    %v114 = vld [vmem:[#allocation5 + $0x1d8] sm:$0xff]
    %v115 = vld [vmem:[#allocation5 + $0x1e0] sm:$0xff]
    %v116 = vld [vmem:[#allocation5 + $0x1e8] sm:$0xff]
    %v117 = vld [vmem:[#allocation5 + $0x1f0] sm:$0xff]
    %v118 = vld [vmem:[#allocation5 + $0x1f8] sm:$0xff]
    %v119 = vld [vmem:[#allocation5 + $0x200] sm:$0xff]
    %v120 = vld [vmem:[#allocation5 + $0x208] sm:$0xff]
    %v121 = vld [vmem:[#allocation5 + $0x210] sm:$0xff]
    %v122 = vld [vmem:[#allocation5 + $0x218] sm:$0xff]
    %v123 = vld [vmem:[#allocation5 + $0x220] sm:$0x33]
    %v124 = vld [vmem:[#allocation5 + $0x228] sm:$0x33]
    %v125 = vunpack.c.l.bf16 %v123
    %v126 = vunpack.c.h.bf16 %v123
    %v127 = vunpack.c.l.bf16 %v124
    %v128 = vunpack.c.h.bf16 %v124
    %v129 = vld [vmem:[#allocation2] sm:$0x3]
    %v130 = vpack.c.bf16 %v129, %v129
    %v131 = vlaneseq
    %v132 = vshrl.u32 %v131, 7
    %v133 = vsub.s32 0, %v132
    %v134 = vrot.slane %v125, %v133
    %v135 = vlaneseq
    %v136 = vshrl.u32 %v135, 7
    %v137 = vsub.s32 0, %v136
    %v138 = vrot.slane %v126, %v137
    %v139 = vlaneseq
    %v140 = vshrl.u32 %v139, 7
    %v141 = vsub.s32 0, %v140
    %v142 = vrot.slane %v127, %v141
    %v143 = vlaneseq
    %v144 = vshrl.u32 %v143, 7
    %v145 = vsub.s32 0, %v144
    %v146 = vrot.slane %v128, %v145
    %v151 = vunpack.c.l.b16 %v55
    %v152 = vunpack.c.h.b16 %v55
    %v153 = vunpack.c.l.b16 %v56
    %v154 = vunpack.c.h.b16 %v56
    %v155 = vunpack.c.l.b16 %v57
    %v156 = vunpack.c.h.b16 %v57
    %v157 = vunpack.c.l.b16 %v58
    %v158 = vunpack.c.h.b16 %v58
    %v159 = vpack.c.b16 %v155, %v151
    %v160 = vpack.c.b16 %v156, %v152
    %v161 = vpack.c.b16 %v157, %v153
    %v162 = vpack.c.b16 %v158, %v154
    %vm167 = vcmask 130048
    %v169 = vsel %vm167, %v130, 0
    %171 = vmatprep.subr.bf16.mxu0 0
    %172 = vmatpush1.bf16.msra.mxu0 0
    %173 = vmatprep.subr.bf16.mxu0 0
    %174 = vmatpush1.bf16.msra.mxu0 0
    %175 = vmatprep.subr.bf16.mxu0 0
    %176 = vmatpush1.bf16.msra.mxu0 0
    %177 = vmatprep.subr.bf16.mxu0 0
    %178 = vmatpush1.bf16.msra.mxu0 0
    %179 = vmatprep.subr.bf16.mxu0 0
    %180 = vmatpush1.bf16.msra.mxu0 0
    %181 = vmatprep.subr.bf16.mxu0 0
    %182 = vmatpush1.bf16.msra.mxu0 0
    %183 = vmatprep.subr.bf16.mxu0 0
    %184 = vmatpush1.bf16.msra.mxu0 0
    %185 = vmatprep.subr.bf16.mxu0 %v160
    %186 = vmatpush1.bf16.msra.mxu0 %v159
    %187 = vmatprep.subr.bf16.mxu0 0
    %188 = vmatpush2.bf16.msra.mxu0 0
    %189 = vmatprep.subr.bf16.mxu0 0
    %190 = vmatpush2.bf16.msra.mxu0 0
    %191 = vmatprep.subr.bf16.mxu0 0
    %192 = vmatpush2.bf16.msra.mxu0 0
    %193 = vmatprep.subr.bf16.mxu0 0
    %194 = vmatpush2.bf16.msra.mxu0 0
    %195 = vmatprep.subr.bf16.mxu0 0
    %196 = vmatpush2.bf16.msra.mxu0 0
    %197 = vmatprep.subr.bf16.mxu0 0
    %198 = vmatpush2.bf16.msra.mxu0 0
    %199 = vmatprep.subr.bf16.mxu0 0
    %200 = vmatpush2.bf16.msra.mxu0 0
    %201 = vmatprep.subr.bf16.mxu0 0
    %202 = vmatpush2.bf16.msra.mxu0 0
    %203 = vmatprep.mubr.bf16.mxu0 0
    %204 = vmatmul.mubr.bf16.gmra.mxu0 %v169
    %v205 = vpop.f32.mrf.mxu0
    %v206 = vadd.f32 %v134, %v205
    %v207 = vpop.f32.mrf.mxu0
    %v208 = vadd.f32 %v138, %v207
    %v209 = vpop.f32.mrf.mxu0
    %v210 = vpop.f32.mrf.mxu0
    %211 = vdwg.mxu0
    %212 = vmatprep.subr.bf16.mxu0 0
    %213 = vmatpush1.bf16.msra.mxu0 0
    %214 = vmatprep.subr.bf16.mxu0 0
    %215 = vmatpush1.bf16.msra.mxu0 0
    %216 = vmatprep.subr.bf16.mxu0 0
    %217 = vmatpush1.bf16.msra.mxu0 0
    %218 = vmatprep.subr.bf16.mxu0 0
    %219 = vmatpush1.bf16.msra.mxu0 0
    %220 = vmatprep.subr.bf16.mxu0 0
    %221 = vmatpush1.bf16.msra.mxu0 0
    %222 = vmatprep.subr.bf16.mxu0 0
    %223 = vmatpush1.bf16.msra.mxu0 0
    %224 = vmatprep.subr.bf16.mxu0 0
    %225 = vmatpush1.bf16.msra.mxu0 0
    %226 = vmatprep.subr.bf16.mxu0 %v162
    %227 = vmatpush1.bf16.msra.mxu0 %v161
    %228 = vmatprep.subr.bf16.mxu0 0
    %229 = vmatpush2.bf16.msra.mxu0 0
    %230 = vmatprep.subr.bf16.mxu0 0
    %231 = vmatpush2.bf16.msra.mxu0 0
    %232 = vmatprep.subr.bf16.mxu0 0
    %233 = vmatpush2.bf16.msra.mxu0 0
    %234 = vmatprep.subr.bf16.mxu0 0
    %235 = vmatpush2.bf16.msra.mxu0 0
    %236 = vmatprep.subr.bf16.mxu0 0
    %237 = vmatpush2.bf16.msra.mxu0 0
    %238 = vmatprep.subr.bf16.mxu0 0
    %239 = vmatpush2.bf16.msra.mxu0 0
    %240 = vmatprep.subr.bf16.mxu0 0
    %241 = vmatpush2.bf16.msra.mxu0 0
    %242 = vmatprep.subr.bf16.mxu0 0
    %243 = vmatpush2.bf16.msra.mxu0 0
    %244 = vmatprep.mubr.bf16.mxu0 0
    %245 = vmatmul.mubr.bf16.gmra.mxu0 %v169
    %v246 = vpop.f32.mrf.mxu0
    %v247 = vadd.f32 %v142, %v246
    %v248 = vpop.f32.mrf.mxu0
    %v249 = vadd.f32 %v146, %v248
    %v250 = vpop.f32.mrf.mxu0
    %v251 = vpop.f32.mrf.mxu0
    %252 = vdwg.mxu0
    %v253 = vmax.f32 %v206, 0.0
    %v254 = vmax.f32 %v208, 0.0
    %v255 = vmax.f32 %v247, 0.0
    %v256 = vmax.f32 %v249, 0.0
    %v257 = vpack.c.bf16 %v253, %v253
    %v258 = vpack.c.bf16 %v254, %v254
    %v259 = vpack.c.bf16 %v255, %v255
    %v260 = vpack.c.bf16 %v256, %v256
    %v261 = vlaneseq
    %v262 = vshrl.u32 %v261, 7
    %v263 = vsub.s32 1, %v262
    %v264 = vrot.slane %v125, %v263
    %v265 = vlaneseq
    %v266 = vshrl.u32 %v265, 7
    %v267 = vsub.s32 1, %v266
    %v268 = vrot.slane %v126, %v267
    %v301 = vunpack.c.l.b16 %v59
    %v302 = vunpack.c.h.b16 %v59
    %v303 = vunpack.c.l.b16 %v61
    %v304 = vunpack.c.h.b16 %v61
    %v305 = vunpack.c.l.b16 %v63
    %v306 = vunpack.c.h.b16 %v63
    %v307 = vunpack.c.l.b16 %v65
    %v308 = vunpack.c.h.b16 %v65
    %v309 = vunpack.c.l.b16 %v67
    %v310 = vunpack.c.h.b16 %v67
    %v311 = vunpack.c.l.b16 %v69
    %v312 = vunpack.c.h.b16 %v69
    %v313 = vunpack.c.l.b16 %v71
    %v314 = vunpack.c.h.b16 %v71
    %v315 = vunpack.c.l.b16 %v73
    %v316 = vunpack.c.h.b16 %v73
    %v317 = vunpack.c.l.b16 %v75
    %v318 = vunpack.c.h.b16 %v75
    %v319 = vunpack.c.l.b16 %v77
    %v320 = vunpack.c.h.b16 %v77
    %v321 = vunpack.c.l.b16 %v79
    %v322 = vunpack.c.h.b16 %v79
    %v323 = vunpack.c.l.b16 %v81
    %v324 = vunpack.c.h.b16 %v81
    %v325 = vunpack.c.l.b16 %v83
    %v326 = vunpack.c.h.b16 %v83
    %v327 = vunpack.c.l.b16 %v85
    %v328 = vunpack.c.h.b16 %v85
    %v329 = vunpack.c.l.b16 %v87
    %v330 = vunpack.c.h.b16 %v87
    %v331 = vunpack.c.l.b16 %v89
    %v332 = vunpack.c.h.b16 %v89
    %v333 = vunpack.c.l.b16 %v91
    %v334 = vunpack.c.h.b16 %v91
    %v335 = vunpack.c.l.b16 %v93
    %v336 = vunpack.c.h.b16 %v93
    %v337 = vunpack.c.l.b16 %v95
    %v338 = vunpack.c.h.b16 %v95
    %v339 = vunpack.c.l.b16 %v97
    %v340 = vunpack.c.h.b16 %v97
    %v341 = vunpack.c.l.b16 %v99
    %v342 = vunpack.c.h.b16 %v99
    %v343 = vunpack.c.l.b16 %v101
    %v344 = vunpack.c.h.b16 %v101
    %v345 = vunpack.c.l.b16 %v103
    %v346 = vunpack.c.h.b16 %v103
    %v347 = vunpack.c.l.b16 %v105
    %v348 = vunpack.c.h.b16 %v105
    %v349 = vunpack.c.l.b16 %v107
    %v350 = vunpack.c.h.b16 %v107
    %v351 = vunpack.c.l.b16 %v109
    %v352 = vunpack.c.h.b16 %v109
    %v353 = vunpack.c.l.b16 %v111
    %v354 = vunpack.c.h.b16 %v111
    %v355 = vunpack.c.l.b16 %v113
    %v356 = vunpack.c.h.b16 %v113
    %v357 = vunpack.c.l.b16 %v115
    %v358 = vunpack.c.h.b16 %v115
    %v359 = vunpack.c.l.b16 %v117
    %v360 = vunpack.c.h.b16 %v117
    %v361 = vunpack.c.l.b16 %v119
    %v362 = vunpack.c.h.b16 %v119
    %v363 = vunpack.c.l.b16 %v121
    %v364 = vunpack.c.h.b16 %v121
    %v365 = vpack.c.b16 %v303, %v301
    %v366 = vpack.c.b16 %v304, %v302
    %v367 = vpack.c.b16 %v307, %v305
    %v368 = vpack.c.b16 %v308, %v306
    %v369 = vpack.c.b16 %v311, %v309
    %v370 = vpack.c.b16 %v312, %v310
    %v371 = vpack.c.b16 %v315, %v313
    %v372 = vpack.c.b16 %v316, %v314
    %v373 = vpack.c.b16 %v319, %v317
    %v374 = vpack.c.b16 %v320, %v318
    %v375 = vpack.c.b16 %v323, %v321
    %v376 = vpack.c.b16 %v324, %v322
    %v377 = vpack.c.b16 %v327, %v325
    %v378 = vpack.c.b16 %v328, %v326
    %v379 = vpack.c.b16 %v331, %v329
    %v380 = vpack.c.b16 %v332, %v330
    %v381 = vpack.c.b16 %v335, %v333
    %v382 = vpack.c.b16 %v336, %v334
    %v383 = vpack.c.b16 %v339, %v337
    %v384 = vpack.c.b16 %v340, %v338
    %v385 = vpack.c.b16 %v343, %v341
    %v386 = vpack.c.b16 %v344, %v342
    %v387 = vpack.c.b16 %v347, %v345
    %v388 = vpack.c.b16 %v348, %v346
    %v389 = vpack.c.b16 %v351, %v349
    %v390 = vpack.c.b16 %v352, %v350
    %v391 = vpack.c.b16 %v355, %v353
    %v392 = vpack.c.b16 %v356, %v354
    %v393 = vpack.c.b16 %v359, %v357
    %v394 = vpack.c.b16 %v360, %v358
    %v395 = vpack.c.b16 %v363, %v361
    %v396 = vpack.c.b16 %v364, %v362
    %429 = vmatprep.subr.bf16.mxu0 %v380
    %430 = vmatpush1.bf16.msra.mxu0 %v379
    %431 = vmatprep.subr.bf16.mxu0 %v378
    %432 = vmatpush1.bf16.msra.mxu0 %v377
    %433 = vmatprep.subr.bf16.mxu0 %v376
    %434 = vmatpush1.bf16.msra.mxu0 %v375
    %435 = vmatprep.subr.bf16.mxu0 %v374
    %436 = vmatpush1.bf16.msra.mxu0 %v373
    %437 = vmatprep.subr.bf16.mxu0 %v372
    %438 = vmatpush1.bf16.msra.mxu0 %v371
    %439 = vmatprep.subr.bf16.mxu0 %v370
    %440 = vmatpush1.bf16.msra.mxu0 %v369
    %441 = vmatprep.subr.bf16.mxu0 %v368
    %442 = vmatpush1.bf16.msra.mxu0 %v367
    %443 = vmatprep.subr.bf16.mxu0 %v366
    %444 = vmatpush1.bf16.msra.mxu0 %v365
    %445 = vmatprep.subr.bf16.mxu0 %v396
    %446 = vmatpush2.bf16.msra.mxu0 %v395
    %447 = vmatprep.subr.bf16.mxu0 %v394
    %448 = vmatpush2.bf16.msra.mxu0 %v393
    %449 = vmatprep.subr.bf16.mxu0 %v392
    %450 = vmatpush2.bf16.msra.mxu0 %v391
    %451 = vmatprep.subr.bf16.mxu0 %v390
    %452 = vmatpush2.bf16.msra.mxu0 %v389
    %453 = vmatprep.subr.bf16.mxu0 %v388
    %454 = vmatpush2.bf16.msra.mxu0 %v387
    %455 = vmatprep.subr.bf16.mxu0 %v386
    %456 = vmatpush2.bf16.msra.mxu0 %v385
    %457 = vmatprep.subr.bf16.mxu0 %v384
    %458 = vmatpush2.bf16.msra.mxu0 %v383
    %459 = vmatprep.subr.bf16.mxu0 %v382
    %460 = vmatpush2.bf16.msra.mxu0 %v381
    %461 = vmatprep.mubr.bf16.mxu0 %v258
    %462 = vmatmul.mubr.bf16.gmra.mxu0 %v257
    %v463 = vpop.f32.mrf.mxu0
    %v464 = vadd.f32 %v264, %v463
    %v465 = vpop.f32.mrf.mxu0
    %v466 = vadd.f32 %v268, %v465
    %v467 = vpop.f32.mrf.mxu0
    %v468 = vpop.f32.mrf.mxu0
    %469 = vdwg.mxu0
    %v470 = vmax.f32 %v464, 0.0
    %v471 = vmax.f32 %v466, 0.0
    %v472 = vlaneseq
    %v473 = vshrl.u32 %v472, 7
    %v474 = vsub.s32 1, %v473
    %v475 = vrot.slane %v127, %v474
    %v476 = vlaneseq
    %v477 = vshrl.u32 %v476, 7
    %v478 = vsub.s32 1, %v477
    %v479 = vrot.slane %v128, %v478
    %v512 = vunpack.c.l.b16 %v60
    %v513 = vunpack.c.h.b16 %v60
    %v514 = vunpack.c.l.b16 %v62
    %v515 = vunpack.c.h.b16 %v62
    %v516 = vunpack.c.l.b16 %v64
    %v517 = vunpack.c.h.b16 %v64
    %v518 = vunpack.c.l.b16 %v66
    %v519 = vunpack.c.h.b16 %v66
    %v520 = vunpack.c.l.b16 %v68
    %v521 = vunpack.c.h.b16 %v68
    %v522 = vunpack.c.l.b16 %v70
    %v523 = vunpack.c.h.b16 %v70
    %v524 = vunpack.c.l.b16 %v72
    %v525 = vunpack.c.h.b16 %v72
    %v526 = vunpack.c.l.b16 %v74
    %v527 = vunpack.c.h.b16 %v74
    %v528 = vunpack.c.l.b16 %v76
    %v529 = vunpack.c.h.b16 %v76
    %v530 = vunpack.c.l.b16 %v78
    %v531 = vunpack.c.h.b16 %v78
    %v532 = vunpack.c.l.b16 %v80
    %v533 = vunpack.c.h.b16 %v80
    %v534 = vunpack.c.l.b16 %v82
    %v535 = vunpack.c.h.b16 %v82
    %v536 = vunpack.c.l.b16 %v84
    %v537 = vunpack.c.h.b16 %v84
    %v538 = vunpack.c.l.b16 %v86
    %v539 = vunpack.c.h.b16 %v86
    %v540 = vunpack.c.l.b16 %v88
    %v541 = vunpack.c.h.b16 %v88
    %v542 = vunpack.c.l.b16 %v90
    %v543 = vunpack.c.h.b16 %v90
    %v544 = vunpack.c.l.b16 %v92
    %v545 = vunpack.c.h.b16 %v92
    %v546 = vunpack.c.l.b16 %v94
    %v547 = vunpack.c.h.b16 %v94
    %v548 = vunpack.c.l.b16 %v96
    %v549 = vunpack.c.h.b16 %v96
    %v550 = vunpack.c.l.b16 %v98
    %v551 = vunpack.c.h.b16 %v98
    %v552 = vunpack.c.l.b16 %v100
    %v553 = vunpack.c.h.b16 %v100
    %v554 = vunpack.c.l.b16 %v102
    %v555 = vunpack.c.h.b16 %v102
    %v556 = vunpack.c.l.b16 %v104
    %v557 = vunpack.c.h.b16 %v104
    %v558 = vunpack.c.l.b16 %v106
    %v559 = vunpack.c.h.b16 %v106
    %v560 = vunpack.c.l.b16 %v108
    %v561 = vunpack.c.h.b16 %v108
    %v562 = vunpack.c.l.b16 %v110
    %v563 = vunpack.c.h.b16 %v110
    %v564 = vunpack.c.l.b16 %v112
    %v565 = vunpack.c.h.b16 %v112
    %v566 = vunpack.c.l.b16 %v114
    %v567 = vunpack.c.h.b16 %v114
    %v568 = vunpack.c.l.b16 %v116
    %v569 = vunpack.c.h.b16 %v116
    %v570 = vunpack.c.l.b16 %v118
    %v571 = vunpack.c.h.b16 %v118
    %v572 = vunpack.c.l.b16 %v120
    %v573 = vunpack.c.h.b16 %v120
    %v574 = vunpack.c.l.b16 %v122
    %v575 = vunpack.c.h.b16 %v122
    %v576 = vpack.c.b16 %v514, %v512
    %v577 = vpack.c.b16 %v515, %v513
    %v578 = vpack.c.b16 %v518, %v516
    %v579 = vpack.c.b16 %v519, %v517
    %v580 = vpack.c.b16 %v522, %v520
    %v581 = vpack.c.b16 %v523, %v521
    %v582 = vpack.c.b16 %v526, %v524
    %v583 = vpack.c.b16 %v527, %v525
    %v584 = vpack.c.b16 %v530, %v528
    %v585 = vpack.c.b16 %v531, %v529
    %v586 = vpack.c.b16 %v534, %v532
    %v587 = vpack.c.b16 %v535, %v533
    %v588 = vpack.c.b16 %v538, %v536
    %v589 = vpack.c.b16 %v539, %v537
    %v590 = vpack.c.b16 %v542, %v540
    %v591 = vpack.c.b16 %v543, %v541
    %v592 = vpack.c.b16 %v546, %v544
    %v593 = vpack.c.b16 %v547, %v545
    %v594 = vpack.c.b16 %v550, %v548
    %v595 = vpack.c.b16 %v551, %v549
    %v596 = vpack.c.b16 %v554, %v552
    %v597 = vpack.c.b16 %v555, %v553
    %v598 = vpack.c.b16 %v558, %v556
    %v599 = vpack.c.b16 %v559, %v557
    %v600 = vpack.c.b16 %v562, %v560
    %v601 = vpack.c.b16 %v563, %v561
    %v602 = vpack.c.b16 %v566, %v564
    %v603 = vpack.c.b16 %v567, %v565
    %v604 = vpack.c.b16 %v570, %v568
    %v605 = vpack.c.b16 %v571, %v569
    %v606 = vpack.c.b16 %v574, %v572
    %v607 = vpack.c.b16 %v575, %v573
    %640 = vmatprep.subr.bf16.mxu0 %v591
    %641 = vmatpush1.bf16.msra.mxu0 %v590
    %642 = vmatprep.subr.bf16.mxu0 %v589
    %643 = vmatpush1.bf16.msra.mxu0 %v588
    %644 = vmatprep.subr.bf16.mxu0 %v587
    %645 = vmatpush1.bf16.msra.mxu0 %v586
    %646 = vmatprep.subr.bf16.mxu0 %v585
    %647 = vmatpush1.bf16.msra.mxu0 %v584
    %648 = vmatprep.subr.bf16.mxu0 %v583
    %649 = vmatpush1.bf16.msra.mxu0 %v582
    %650 = vmatprep.subr.bf16.mxu0 %v581
    %651 = vmatpush1.bf16.msra.mxu0 %v580
    %652 = vmatprep.subr.bf16.mxu0 %v579
    %653 = vmatpush1.bf16.msra.mxu0 %v578
    %654 = vmatprep.subr.bf16.mxu0 %v577
    %655 = vmatpush1.bf16.msra.mxu0 %v576
    %656 = vmatprep.subr.bf16.mxu0 %v607
    %657 = vmatpush2.bf16.msra.mxu0 %v606
    %658 = vmatprep.subr.bf16.mxu0 %v605
    %659 = vmatpush2.bf16.msra.mxu0 %v604
    %660 = vmatprep.subr.bf16.mxu0 %v603
    %661 = vmatpush2.bf16.msra.mxu0 %v602
    %662 = vmatprep.subr.bf16.mxu0 %v601
    %663 = vmatpush2.bf16.msra.mxu0 %v600
    %664 = vmatprep.subr.bf16.mxu0 %v599
    %665 = vmatpush2.bf16.msra.mxu0 %v598
    %666 = vmatprep.subr.bf16.mxu0 %v597
    %667 = vmatpush2.bf16.msra.mxu0 %v596
    %668 = vmatprep.subr.bf16.mxu0 %v595
    %669 = vmatpush2.bf16.msra.mxu0 %v594
    %670 = vmatprep.subr.bf16.mxu0 %v593
    %671 = vmatpush2.bf16.msra.mxu0 %v592
    %672 = vmatprep.mubr.bf16.mxu0 %v260
    %673 = vmatmul.mubr.bf16.gmra.mxu0 %v259
    %v674 = vpop.f32.mrf.mxu0
    %v675 = vadd.f32 %v475, %v674
    %v676 = vpop.f32.mrf.mxu0
    %v677 = vadd.f32 %v479, %v676
    %v678 = vpop.f32.mrf.mxu0
    %v679 = vpop.f32.mrf.mxu0
    %680 = vdwg.mxu0
    %v681 = vmax.f32 %v675, 0.0
    %v682 = vmax.f32 %v677, 0.0
    %v683 = vpack.c.bf16 %v470, %v470
    %v684 = vpack.c.bf16 %v471, %v471
    %v685 = vpack.c.bf16 %v681, %v681
    %v686 = vpack.c.bf16 %v682, %v682
    %v687 = vld [vmem:[#allocation7] sm:$0xf]
    %v688 = vld [vmem:[#allocation7 + $0x4] sm:$0xf]
    %v689 = vld [vmem:[#allocation7 + $0x8] sm:$0xf]
    %v690 = vld [vmem:[#allocation7 + $0xc] sm:$0xf]
    %v691 = vld [vmem:[#allocation7 + $0x10] sm:$0xf]
    %v692 = vld [vmem:[#allocation7 + $0x14] sm:$0xf]
    %v693 = vld [vmem:[#allocation7 + $0x18] sm:$0xf]
    %v694 = vld [vmem:[#allocation7 + $0x1c] sm:$0xf]
    %v695 = vld [vmem:[#allocation7 + $0x20] sm:$0xf]
    %v696 = vld [vmem:[#allocation7 + $0x24] sm:$0xf]
    %v697 = vld [vmem:[#allocation7 + $0x28] sm:$0xf]
    %v698 = vld [vmem:[#allocation7 + $0x2c] sm:$0xf]
    %v699 = vld [vmem:[#allocation7 + $0x30] sm:$0xf]
    %v700 = vld [vmem:[#allocation7 + $0x34] sm:$0xf]
    %v701 = vld [vmem:[#allocation7 + $0x38] sm:$0xf]
    %v702 = vld [vmem:[#allocation7 + $0x3c] sm:$0xf]
    %v703 = vld [vmem:[#allocation7 + $0x40] sm:$0xf]
    %v704 = vld [vmem:[#allocation7 + $0x44] sm:$0xf]
    %v705 = vld [vmem:[#allocation7 + $0x48] sm:$0xf]
    %v706 = vld [vmem:[#allocation7 + $0x4c] sm:$0xf]
    %v707 = vld [vmem:[#allocation7 + $0x50] sm:$0xf]
    %v708 = vld [vmem:[#allocation7 + $0x54] sm:$0xf]
    %v709 = vld [vmem:[#allocation7 + $0x58] sm:$0xf]
    %v710 = vld [vmem:[#allocation7 + $0x5c] sm:$0xf]
    %v711 = vld [vmem:[#allocation7 + $0x60] sm:$0xf]
    %v712 = vld [vmem:[#allocation7 + $0x64] sm:$0xf]
    %v713 = vld [vmem:[#allocation7 + $0x68] sm:$0xf]
    %v714 = vld [vmem:[#allocation7 + $0x6c] sm:$0xf]
    %v715 = vld [vmem:[#allocation7 + $0x70] sm:$0xf]
    %v716 = vld [vmem:[#allocation7 + $0x74] sm:$0xf]
    %v717 = vld [vmem:[#allocation7 + $0x78] sm:$0xf]
    %v718 = vld [vmem:[#allocation7 + $0x7c] sm:$0xf]
    %v719 = vld [vmem:[#allocation7 + $0x80] sm:$0xf]
    %v720 = vld [vmem:[#allocation7 + $0x84] sm:$0xf]
    %v721 = vld [vmem:[#allocation7 + $0x88] sm:$0xf]
    %v722 = vld [vmem:[#allocation7 + $0x8c] sm:$0xf]
    %v723 = vld [vmem:[#allocation7 + $0x90] sm:$0xf]
    %v724 = vld [vmem:[#allocation7 + $0x94] sm:$0xf]
    %v725 = vld [vmem:[#allocation7 + $0x98] sm:$0xf]
    %v726 = vld [vmem:[#allocation7 + $0x9c] sm:$0xf]
    %v727 = vld [vmem:[#allocation7 + $0xa0] sm:$0xf]
    %v728 = vld [vmem:[#allocation7 + $0xa4] sm:$0xf]
    %v729 = vld [vmem:[#allocation7 + $0xa8] sm:$0xf]
    %v730 = vld [vmem:[#allocation7 + $0xac] sm:$0xf]
    %v731 = vld [vmem:[#allocation7 + $0xb0] sm:$0xf]
    %v732 = vld [vmem:[#allocation7 + $0xb4] sm:$0xf]
    %v733 = vld [vmem:[#allocation7 + $0xb8] sm:$0xf]
    %v734 = vld [vmem:[#allocation7 + $0xbc] sm:$0xf]
    %v735 = vld [vmem:[#allocation7 + $0xc0] sm:$0xf]
    %v736 = vld [vmem:[#allocation7 + $0xc4] sm:$0xf]
    %v737 = vld [vmem:[#allocation7 + $0xc8] sm:$0xf]
    %v738 = vld [vmem:[#allocation7 + $0xcc] sm:$0xf]
    %v739 = vld [vmem:[#allocation7 + $0xd0] sm:$0xf]
    %v740 = vld [vmem:[#allocation7 + $0xd4] sm:$0xf]
    %v741 = vld [vmem:[#allocation7 + $0xd8] sm:$0xf]
    %v742 = vld [vmem:[#allocation7 + $0xdc] sm:$0xf]
    %v743 = vld [vmem:[#allocation7 + $0xe0] sm:$0xf]
    %v744 = vld [vmem:[#allocation7 + $0xe4] sm:$0xf]
    %v745 = vld [vmem:[#allocation7 + $0xe8] sm:$0xf]
    %v746 = vld [vmem:[#allocation7 + $0xec] sm:$0xf]
    %v747 = vld [vmem:[#allocation7 + $0xf0] sm:$0xf]
    %v748 = vld [vmem:[#allocation7 + $0xf4] sm:$0xf]
    %v749 = vld [vmem:[#allocation7 + $0xf8] sm:$0xf]
    %v750 = vld [vmem:[#allocation7 + $0xfc] sm:$0xf]
    %v751 = vlaneseq
    %v752 = vshrl.u32 %v751, 7
    %v753 = vsub.s32 2, %v752
    %v754 = vrot.slane %v125, %v753
    %v819 = vunpack.c.l.b16 %v687
    %v820 = vunpack.c.l.b16 %v688
    %v821 = vunpack.c.l.b16 %v689
    %v822 = vunpack.c.l.b16 %v690
    %v823 = vunpack.c.l.b16 %v691
    %v824 = vunpack.c.l.b16 %v692
    %v825 = vunpack.c.l.b16 %v693
    %v826 = vunpack.c.l.b16 %v694
    %v827 = vunpack.c.l.b16 %v695
    %v828 = vunpack.c.l.b16 %v696
    %v829 = vunpack.c.l.b16 %v697
    %v830 = vunpack.c.l.b16 %v698
    %v831 = vunpack.c.l.b16 %v699
    %v832 = vunpack.c.l.b16 %v700
    %v833 = vunpack.c.l.b16 %v701
    %v834 = vunpack.c.l.b16 %v702
    %v835 = vunpack.c.l.b16 %v703
    %v836 = vunpack.c.l.b16 %v704
    %v837 = vunpack.c.l.b16 %v705
    %v838 = vunpack.c.l.b16 %v706
    %v839 = vunpack.c.l.b16 %v707
    %v840 = vunpack.c.l.b16 %v708
    %v841 = vunpack.c.l.b16 %v709
    %v842 = vunpack.c.l.b16 %v710
    %v843 = vunpack.c.l.b16 %v711
    %v844 = vunpack.c.l.b16 %v712
    %v845 = vunpack.c.l.b16 %v713
    %v846 = vunpack.c.l.b16 %v714
    %v847 = vunpack.c.l.b16 %v715
    %v848 = vunpack.c.l.b16 %v716
    %v849 = vunpack.c.l.b16 %v717
    %v850 = vunpack.c.l.b16 %v718
    %v851 = vunpack.c.l.b16 %v719
    %v852 = vunpack.c.l.b16 %v720
    %v853 = vunpack.c.l.b16 %v721
    %v854 = vunpack.c.l.b16 %v722
    %v855 = vunpack.c.l.b16 %v723
    %v856 = vunpack.c.l.b16 %v724
    %v857 = vunpack.c.l.b16 %v725
    %v858 = vunpack.c.l.b16 %v726
    %v859 = vunpack.c.l.b16 %v727
    %v860 = vunpack.c.l.b16 %v728
    %v861 = vunpack.c.l.b16 %v729
    %v862 = vunpack.c.l.b16 %v730
    %v863 = vunpack.c.l.b16 %v731
    %v864 = vunpack.c.l.b16 %v732
    %v865 = vunpack.c.l.b16 %v733
    %v866 = vunpack.c.l.b16 %v734
    %v867 = vunpack.c.l.b16 %v735
    %v868 = vunpack.c.l.b16 %v736
    %v869 = vunpack.c.l.b16 %v737
    %v870 = vunpack.c.l.b16 %v738
    %v871 = vunpack.c.l.b16 %v739
    %v872 = vunpack.c.l.b16 %v740
    %v873 = vunpack.c.l.b16 %v741
    %v874 = vunpack.c.l.b16 %v742
    %v875 = vunpack.c.l.b16 %v743
    %v876 = vunpack.c.l.b16 %v744
    %v877 = vunpack.c.l.b16 %v745
    %v878 = vunpack.c.l.b16 %v746
    %v879 = vunpack.c.l.b16 %v747
    %v880 = vunpack.c.l.b16 %v748
    %v881 = vunpack.c.l.b16 %v749
    %v882 = vunpack.c.l.b16 %v750
    %v883 = vpack.c.b16 %v820, %v819
    %v884 = vpack.c.b16 %v822, %v821
    %v885 = vpack.c.b16 %v824, %v823
    %v886 = vpack.c.b16 %v826, %v825
    %v887 = vpack.c.b16 %v828, %v827
    %v888 = vpack.c.b16 %v830, %v829
    %v889 = vpack.c.b16 %v832, %v831
    %v890 = vpack.c.b16 %v834, %v833
    %v891 = vpack.c.b16 %v836, %v835
    %v892 = vpack.c.b16 %v838, %v837
    %v893 = vpack.c.b16 %v840, %v839
    %v894 = vpack.c.b16 %v842, %v841
    %v895 = vpack.c.b16 %v844, %v843
    %v896 = vpack.c.b16 %v846, %v845
    %v897 = vpack.c.b16 %v848, %v847
    %v898 = vpack.c.b16 %v850, %v849
    %v899 = vpack.c.b16 %v852, %v851
    %v900 = vpack.c.b16 %v854, %v853
    %v901 = vpack.c.b16 %v856, %v855
    %v902 = vpack.c.b16 %v858, %v857
    %v903 = vpack.c.b16 %v860, %v859
    %v904 = vpack.c.b16 %v862, %v861
    %v905 = vpack.c.b16 %v864, %v863
    %v906 = vpack.c.b16 %v866, %v865
    %v907 = vpack.c.b16 %v868, %v867
    %v908 = vpack.c.b16 %v870, %v869
    %v909 = vpack.c.b16 %v872, %v871
    %v910 = vpack.c.b16 %v874, %v873
    %v911 = vpack.c.b16 %v876, %v875
    %v912 = vpack.c.b16 %v878, %v877
    %v913 = vpack.c.b16 %v880, %v879
    %v914 = vpack.c.b16 %v882, %v881
    %947 = vmatprep.subr.bf16.mxu0 0
    %948 = vmatpush1.bf16.msra.mxu0 %v890
    %949 = vmatprep.subr.bf16.mxu0 0
    %950 = vmatpush1.bf16.msra.mxu0 %v889
    %951 = vmatprep.subr.bf16.mxu0 0
    %952 = vmatpush1.bf16.msra.mxu0 %v888
    %953 = vmatprep.subr.bf16.mxu0 0
    %954 = vmatpush1.bf16.msra.mxu0 %v887
    %955 = vmatprep.subr.bf16.mxu0 0
    %956 = vmatpush1.bf16.msra.mxu0 %v886
    %957 = vmatprep.subr.bf16.mxu0 0
    %958 = vmatpush1.bf16.msra.mxu0 %v885
    %959 = vmatprep.subr.bf16.mxu0 0
    %960 = vmatpush1.bf16.msra.mxu0 %v884
    %961 = vmatprep.subr.bf16.mxu0 0
    %962 = vmatpush1.bf16.msra.mxu0 %v883
    %963 = vmatprep.subr.bf16.mxu0 0
    %964 = vmatpush2.bf16.msra.mxu0 %v898
    %965 = vmatprep.subr.bf16.mxu0 0
    %966 = vmatpush2.bf16.msra.mxu0 %v897
    %967 = vmatprep.subr.bf16.mxu0 0
    %968 = vmatpush2.bf16.msra.mxu0 %v896
    %969 = vmatprep.subr.bf16.mxu0 0
    %970 = vmatpush2.bf16.msra.mxu0 %v895
    %971 = vmatprep.subr.bf16.mxu0 0
    %972 = vmatpush2.bf16.msra.mxu0 %v894
    %973 = vmatprep.subr.bf16.mxu0 0
    %974 = vmatpush2.bf16.msra.mxu0 %v893
    %975 = vmatprep.subr.bf16.mxu0 0
    %976 = vmatpush2.bf16.msra.mxu0 %v892
    %977 = vmatprep.subr.bf16.mxu0 0
    %978 = vmatpush2.bf16.msra.mxu0 %v891
    %979 = vmatprep.mubr.bf16.mxu0 %v684
    %980 = vmatmul.mubr.bf16.gmra.mxu0 %v683
    %v981 = vpop.f32.mrf.mxu0
    %v982 = vadd.f32 %v754, %v981
    %v983 = vpop.f32.mrf.mxu0
    %v984 = vpop.f32.mrf.mxu0
    %v985 = vpop.f32.mrf.mxu0
    %986 = vdwg.mxu0
    %987 = vmatprep.subr.bf16.mxu0 0
    %988 = vmatpush1.bf16.msra.mxu0 %v906
    %989 = vmatprep.subr.bf16.mxu0 0
    %990 = vmatpush1.bf16.msra.mxu0 %v905
    %991 = vmatprep.subr.bf16.mxu0 0
    %992 = vmatpush1.bf16.msra.mxu0 %v904
    %993 = vmatprep.subr.bf16.mxu0 0
    %994 = vmatpush1.bf16.msra.mxu0 %v903
    %995 = vmatprep.subr.bf16.mxu0 0
    %996 = vmatpush1.bf16.msra.mxu0 %v902
    %997 = vmatprep.subr.bf16.mxu0 0
    %998 = vmatpush1.bf16.msra.mxu0 %v901
    %999 = vmatprep.subr.bf16.mxu0 0
    %1000 = vmatpush1.bf16.msra.mxu0 %v900
    %1001 = vmatprep.subr.bf16.mxu0 0
    %1002 = vmatpush1.bf16.msra.mxu0 %v899
    %1003 = vmatprep.subr.bf16.mxu0 0
    %1004 = vmatpush2.bf16.msra.mxu0 %v914
    %1005 = vmatprep.subr.bf16.mxu0 0
    %1006 = vmatpush2.bf16.msra.mxu0 %v913
    %1007 = vmatprep.subr.bf16.mxu0 0
    %1008 = vmatpush2.bf16.msra.mxu0 %v912
    %1009 = vmatprep.subr.bf16.mxu0 0
    %1010 = vmatpush2.bf16.msra.mxu0 %v911
    %1011 = vmatprep.subr.bf16.mxu0 0
    %1012 = vmatpush2.bf16.msra.mxu0 %v910
    %1013 = vmatprep.subr.bf16.mxu0 0
    %1014 = vmatpush2.bf16.msra.mxu0 %v909
    %1015 = vmatprep.subr.bf16.mxu0 0
    %1016 = vmatpush2.bf16.msra.mxu0 %v908
    %1017 = vmatprep.subr.bf16.mxu0 0
    %1018 = vmatpush2.bf16.msra.mxu0 %v907
    %1019 = vmatprep.mubr.bf16.mxu0 %v686
    %1020 = vmatmul.mubr.bf16.gmra.mxu0 %v685
    %v1021 = vpop.f32.mrf.mxu0
    %v1022 = vadd.f32 %v982, %v1021
    %v1023 = vpop.f32.mrf.mxu0
    %v1024 = vpop.f32.mrf.mxu0
    %v1025 = vpop.f32.mrf.mxu0
    %1026 = vdwg.mxu0
    %v1027 = vlaneseq
    %v1028 = vand.u32 %v1027, 127
    %vm1029 = vcmp.lt.s32.totalorder %v1028, 4
    %vm1030 = vcmp.ge.s32.totalorder %v1028, 4
    %vm1031 = vcmp.lt.s32.totalorder %v1028, 10
    %vm1032 = vmand %vm1030, %vm1031
    %v1033 = vsel %vm1029, %v1022, -3.4028235e+38
    %vm1034 = vcmask 1041408
    %v1035 = vsel %vm1034, %v1033, -inf
    %1036 = vmax.xlane.f32.xlu0 %v1035
    %v1037 = vpop.xlane.xlu0 %1036
    %v1038 = vsub.f32 %v1033, %v1037
    %v1039 = vmul.f32 %v1038, 1.442695
    %v1040 = vpow.pop %v1039
    %v1041 = vsel %vm1034, %v1040, 0.0
    %1042 = vadd.xlane.f32.xlu0 %v1041
    %v1043 = vpop.xlane.xlu0 %1042
    %v1044 = vrcp.pop %v1043
    %v1045 = vmul.f32 %v1040, %v1044
    %v1046 = vtanh.pop %v1022
    %v1047 = vsel %vm1032, %v1046, 0.0
    %v1048 = vadd.f32 %v1045, %v1047
    %1049 = vst [vmem:[#allocation8] sm:$0x3] %v1048
    // Predicated region
    $region26: #{tpu_custom_call.1} parent=1 // pred_check
      _
    $region27: #{tpu_custom_call.1} parent=1 // pred_check_branch
      %1051 = sbr.rel (0) target = $region29
    $region28: #{tpu_custom_call.1} parent=1 // pred_region
      %s1053 = ssub.s32 32, 32
      %1054 = vsyncadd [#allocation4], %s1053
      %s1056 = sshll.u32 [#allocation8], 4
      %s1057 = int_to_ptr.vmem [resolvable:$true] %s1056
      %1059 = dma.vmem_to_hbm [thread:$0]  %s1057, 32, %s3, [#allocation4]
    $region29: #{tpu_custom_call.1} parent=1 // pred_fallthru
      _
    // Predicated region
    $region30: #{tpu_custom_call.1} parent=1 // pred_check
      _
    $region31: #{tpu_custom_call.1} parent=1 // pred_check_branch
      %1061 = sbr.rel (0) target = $region33
    $region32: #{tpu_custom_call.1} parent=1 // pred_region
      %1062 = dma.done [#allocation4], 32
    $region33: #{tpu_custom_call.1} parent=1 // pred_fallthru
      _
    %1063 = vsyncpa [#allocation3], 1
    %1064 = vsyncpa [#allocation6], 1
    %1065 = vsyncpa [#allocation4], 1

</llo_original>
